<compile_context>
chip_gen: v5e
topology: v5e:2x2
jax: 0.10.0
libtpu: 0.0.40
codegen_flags: <defaults>
</compile_context>

<pallas_src>
import functools

import jax
import jax.numpy as jnp
from jax.experimental import pallas as pl
from jax.experimental.pallas import tpu as pltpu

EPS = 1e-5


def _round_up(a, b):
    return -(-a // b) * b


def _bn_stats_kernel(x_ref, gb_ref, ss_ref, sum_ref, sumsq_ref, *, n_rows):
    """Accumulate batch sum / sum-of-squares; at the end emit folded (scale, shift)."""
    i = pl.program_id(0)

    @pl.when(i == 0)
    def _init():
        sum_ref[...] = jnp.zeros_like(sum_ref)
        sumsq_ref[...] = jnp.zeros_like(sumsq_ref)

    x = x_ref[...].astype(jnp.float32)                         # (TN, Cp)
    sum_ref[...] += jnp.sum(x, axis=0, keepdims=True)          # one pass over x
    sumsq_ref[...] += jnp.sum(x * x, axis=0, keepdims=True)

    @pl.when(i == pl.num_programs(0) - 1)
    def _finalize():
        inv_n = jnp.float32(1.0 / n_rows)                      # real batch size (pad rows are 0)
        mean = sum_ref[...] * inv_n
        var = sumsq_ref[...] * inv_n - mean * mean             # biased variance (training mode)
        gamma = gb_ref[0:1, :].astype(jnp.float32)
        beta = gb_ref[1:2, :].astype(jnp.float32)
        scale = gamma * jax.lax.rsqrt(var + EPS)               # rsqrt -> EUP slot
        shift = beta - mean * scale
        ss_ref[...] = jnp.concatenate([scale, shift], axis=0)  # (2, Cp)


def _main_kernel(ss_ref, x_ref, w_ref, o_ref, *, compute_dtype):
    """y_tile = ReLU(x_tile * scale + shift) @ w_tile  (f32 accumulation on the MXU)."""
    scale = ss_ref[0:1, :]                                     # (1, Cp) f32
    shift = ss_ref[1:2, :]
    x = x_ref[...].astype(jnp.float32)                         # (TN, Cp)
    x_act = jnp.maximum(x * scale + shift, 0.0).astype(compute_dtype)
    y = jnp.dot(x_act, w_ref[...], preferred_element_type=jnp.float32)
    o_ref[...] = y.astype(o_ref.dtype)


def linear_path_preact(x, gamma, beta, w_t, *,
                       compute_dtype=jnp.bfloat16, tn=256, th=256):
    """x: (N, C); gamma/beta: (C,) BN affine; w_t: (C, H) = PyTorch fc1.weight.T."""
    N, C = x.shape
    Cw, H = w_t.shape
    assert Cw == C

    TN = min(tn, _round_up(N, 8))
    TH = min(th, _round_up(H, 128))
    N_pad = _round_up(N, TN)
    H_pad = _round_up(H, TH)
    C_pad = _round_up(C, 128)

    x_p = jnp.pad(x.astype(jnp.float32), ((0, N_pad - N), (0, C_pad - C)))
    w_p = jnp.pad(w_t.astype(compute_dtype), ((0, C_pad - C), (0, H_pad - H)))
    gb = jnp.stack(
        [jnp.pad(gamma.astype(jnp.float32), (0, C_pad - C), constant_values=1.0),
         jnp.pad(beta.astype(jnp.float32), (0, C_pad - C))],
        axis=0)                                                # (2, Cp) packed gamma/beta

    grid_n = N_pad // TN
    grid_h = H_pad // TH

    # Pass 1: batch statistics -> folded (scale, shift), packed (2, Cp).
    ss = pl.pallas_call(
        functools.partial(_bn_stats_kernel, n_rows=N),
        out_shape=jax.ShapeDtypeStruct((2, C_pad), jnp.float32),
        grid_spec=pltpu.PrefetchScalarGridSpec(
            num_scalar_prefetch=0,
            grid=(grid_n,),
            in_specs=[
                pl.BlockSpec((TN, C_pad), lambda i: (i, 0)),
                pl.BlockSpec((2, C_pad), lambda i: (0, 0)),
            ],
            out_specs=pl.BlockSpec((2, C_pad), lambda i: (0, 0)),
            scratch_shapes=[pltpu.VMEM((1, C_pad), jnp.float32),
                            pltpu.VMEM((1, C_pad), jnp.float32)],
        ),
        compiler_params=pltpu.CompilerParams(
            dimension_semantics=("arbitrary",)),
    )(x_p, gb)

    # Pass 2: fused scale/shift + ReLU + matmul, tiled (H outer, N inner => weight resident).
    out = pl.pallas_call(
        functools.partial(_main_kernel, compute_dtype=compute_dtype),
        out_shape=jax.ShapeDtypeStruct((N_pad, H_pad), x.dtype),
        grid_spec=pltpu.PrefetchScalarGridSpec(
            num_scalar_prefetch=0,
            grid=(grid_h, grid_n),
            in_specs=[
                pl.BlockSpec((2, C_pad), lambda j, i: (0, 0)),   # scale/shift, loaded once
                pl.BlockSpec((TN, C_pad), lambda j, i: (i, 0)),  # x row-tile
                pl.BlockSpec((C_pad, TH), lambda j, i: (0, j)),  # weight tile, resident over i
            ],
            out_specs=pl.BlockSpec((TN, TH), lambda j, i: (i, j)),
        ),
        compiler_params=pltpu.CompilerParams(
            dimension_semantics=("parallel", "parallel")),
    )(ss, x_p, w_p)

    return out[:N, :H]


def _reference(x, gamma, beta, w_t):
    mean = jnp.mean(x, axis=0, keepdims=True)
    var = jnp.mean((x - mean) ** 2, axis=0, keepdims=True)
    x_hat = (x - mean) / jnp.sqrt(var + EPS)
    x_bn = x_hat * gamma[None, :] + beta[None, :]
    return jnp.maximum(x_bn, 0.0) @ w_t


if __name__ == "__main__":
    key = jax.random.PRNGKey(0)
    k_x, k_w, k_g, k_b = jax.random.split(key, 4)

    # Small, deliberately non-128-aligned shapes to exercise the padding path.
    N, C, H = 24, 48, 80  # batch, in_channels, hidden_channels

    x = jax.random.normal(k_x, (N, C), dtype=jnp.float32)
    w_t = jax.random.normal(k_w, (C, H), dtype=jnp.float32) * 0.1  # fc1.weight.T
    gamma = 1.0 + 0.1 * jax.random.normal(k_g, (C,), dtype=jnp.float32)
    beta = 0.1 * jax.random.normal(k_b, (C,), dtype=jnp.float32)

    ref = _reference(x, gamma, beta, w_t)

    # 1) Exact f32 semantics, single N tile.
    out_f32 = jax.block_until_ready(
        linear_path_preact(x, gamma, beta, w_t, compute_dtype=jnp.float32))
    assert out_f32.shape == (N, H)
    assert jnp.allclose(out_f32, ref, atol=1e-4, rtol=1e-4)

    # 2) Exact f32 semantics, multi-tile batch reduction (tn=8 -> 3 N-tiles).
    out_tiled = jax.block_until_ready(
        linear_path_preact(x, gamma, beta, w_t, compute_dtype=jnp.float32, tn=8, th=128))
    assert jnp.allclose(out_tiled, ref, atol=1e-4, rtol=1e-4)

    # 3) Default fast path: bf16 MXU operands with f32 accumulation.
    out_bf16 = jax.block_until_ready(linear_path_preact(x, gamma, beta, w_t))
    assert out_bf16.shape == (N, H)
    assert jnp.allclose(out_bf16, ref, atol=1e-1, rtol=5e-2)

    print("KERNEL_OK")
</pallas_src>

<mosaic_0001>
module attributes {stable_mosaic.version = 11 : i64} {
  func.func @_bn_stats_kernel(%arg0: i32, %arg1: memref<24x128xf32, #tpu.memory_space<vmem>>, %arg2: memref<2x128xf32, #tpu.memory_space<vmem>>, %arg3: memref<2x128xf32, #tpu.memory_space<vmem>>, %arg4: memref<1x128xf32, #tpu.memory_space<vmem>>, %arg5: memref<1x128xf32, #tpu.memory_space<vmem>>) attributes {dimension_semantics = [#tpu.dimension_semantics<arbitrary>], iteration_bounds = array<i64: 1>, scalar_prefetch = 0 : i64, scratch_operands = 2 : i64, tpu.core_type = #tpu.core_type<tc>, window_params = [{transform_indices = @transform_0, window_bounds = array<i64: 24, 128>}, {pipeline_mode = #tpu.pipeline_mode<synchronous>, transform_indices = @transform_1, window_bounds = array<i64: 2, 128>}, {pipeline_mode = #tpu.pipeline_mode<synchronous>, transform_indices = @transform_2, window_bounds = array<i64: 2, 128>}]} {
    %c0_i32 = arith.constant 0 : i32
    %0 = arith.cmpi eq, %arg0, %c0_i32 : i32
    %1 = arith.extui %0 : i1 to i32
    %c0_i32_0 = arith.constant 0 : i32
    %2 = arith.cmpi ne, %1, %c0_i32_0 : i32
    scf.if %2 {
      %cst_13 = arith.constant 0.000000e+00 : f32
      %18 = vector.broadcast %cst_13 : f32 to vector<1x128xf32>
      %c0_14 = arith.constant 0 : index
      %c0_15 = arith.constant 0 : index
      %19 = vector.load %arg4[%c0_14, %c0_15] : memref<1x128xf32, #tpu.memory_space<vmem>>, vector<1x128xf32>
      tpu.vector_store %arg4[%c0_14, %c0_15], %18 {strides = array<i32>} : memref<1x128xf32, #tpu.memory_space<vmem>>, vector<1x128xf32>,
      %cst_16 = arith.constant 0.000000e+00 : f32
      %20 = vector.broadcast %cst_16 : f32 to vector<1x128xf32>
      %c0_17 = arith.constant 0 : index
      %c0_18 = arith.constant 0 : index
      %21 = vector.load %arg5[%c0_17, %c0_18] : memref<1x128xf32, #tpu.memory_space<vmem>>, vector<1x128xf32>
      tpu.vector_store %arg5[%c0_17, %c0_18], %20 {strides = array<i32>} : memref<1x128xf32, #tpu.memory_space<vmem>>, vector<1x128xf32>,
    } else {
    }
    %c0 = arith.constant 0 : index
    %c0_1 = arith.constant 0 : index
    %3 = vector.load %arg1[%c0, %c0_1] : memref<24x128xf32, #tpu.memory_space<vmem>>, vector<24x128xf32>
    %c0_2 = arith.constant 0 : index
    %c0_3 = arith.constant 0 : index
    %4 = vector.load %arg4[%c0_2, %c0_3] : memref<1x128xf32, #tpu.memory_space<vmem>>, vector<1x128xf32>
    %cst = arith.constant dense<0.000000e+00> : vector<128xf32>
    %5 = vector.multi_reduction <add>, %3, %cst [0] : vector<24x128xf32> to vector<128xf32>
    %6 = vector.shape_cast %5 : vector<128xf32> to vector<1x128xf32>
    %7 = arith.addf %4, %6 : vector<1x128xf32>
    %c0_4 = arith.constant 0 : index
    %c0_5 = arith.constant 0 : index
    %8 = vector.load %arg4[%c0_4, %c0_5] : memref<1x128xf32, #tpu.memory_space<vmem>>, vector<1x128xf32>
    tpu.vector_store %arg4[%c0_4, %c0_5], %7 {strides = array<i32>} : memref<1x128xf32, #tpu.memory_space<vmem>>, vector<1x128xf32>,
    %c0_6 = arith.constant 0 : index
    %c0_7 = arith.constant 0 : index
    %9 = vector.load %arg5[%c0_6, %c0_7] : memref<1x128xf32, #tpu.memory_space<vmem>>, vector<1x128xf32>
    %10 = arith.mulf %3, %3 : vector<24x128xf32>
    %cst_8 = arith.constant dense<0.000000e+00> : vector<128xf32>
    %11 = vector.multi_reduction <add>, %10, %cst_8 [0] : vector<24x128xf32> to vector<128xf32>
    %12 = vector.shape_cast %11 : vector<128xf32> to vector<1x128xf32>
    %13 = arith.addf %9, %12 : vector<1x128xf32>
    %c0_9 = arith.constant 0 : index
    %c0_10 = arith.constant 0 : index
    %14 = vector.load %arg5[%c0_9, %c0_10] : memref<1x128xf32, #tpu.memory_space<vmem>>, vector<1x128xf32>
    tpu.vector_store %arg5[%c0_9, %c0_10], %13 {strides = array<i32>} : memref<1x128xf32, #tpu.memory_space<vmem>>, vector<1x128xf32>,
    %c0_i32_11 = arith.constant 0 : i32
    %15 = arith.cmpi eq, %arg0, %c0_i32_11 : i32
    %16 = arith.extui %15 : i1 to i32
    %c0_i32_12 = arith.constant 0 : i32
    %17 = arith.cmpi ne, %16, %c0_i32_12 : i32
    scf.if %17 {
      %c0_13 = arith.constant 0 : index
      %c0_14 = arith.constant 0 : index
      %18 = vector.load %arg4[%c0_13, %c0_14] : memref<1x128xf32, #tpu.memory_space<vmem>>, vector<1x128xf32>
      %cst_15 = arith.constant 0.0416666679 : f32
      %19 = vector.broadcast %cst_15 : f32 to vector<1x128xf32>
      %20 = arith.mulf %18, %19 : vector<1x128xf32>
      %c0_16 = arith.constant 0 : index
      %c0_17 = arith.constant 0 : index
      %21 = vector.load %arg5[%c0_16, %c0_17] : memref<1x128xf32, #tpu.memory_space<vmem>>, vector<1x128xf32>
      %cst_18 = arith.constant 0.0416666679 : f32
      %22 = vector.broadcast %cst_18 : f32 to vector<1x128xf32>
      %23 = arith.mulf %21, %22 : vector<1x128xf32>
      %24 = arith.mulf %20, %20 : vector<1x128xf32>
      %25 = arith.subf %23, %24 : vector<1x128xf32>
      %c0_19 = arith.constant 0 : index
      %c0_20 = arith.constant 0 : index
      %26 = vector.load %arg2[%c0_19, %c0_20] : memref<2x128xf32, #tpu.memory_space<vmem>>, vector<1x128xf32>
      %c1 = arith.constant 1 : index
      %c0_21 = arith.constant 0 : index
      %27 = vector.load %arg2[%c1, %c0_21] : memref<2x128xf32, #tpu.memory_space<vmem>>, vector<1x128xf32>
      %cst_22 = arith.constant 9.99999974E-6 : f32
      %28 = vector.broadcast %cst_22 : f32 to vector<1x128xf32>
      %29 = arith.addf %25, %28 : vector<1x128xf32>
      %30 = math.rsqrt %29 : vector<1x128xf32>
      %31 = arith.mulf %26, %30 : vector<1x128xf32>
      %32 = arith.mulf %20, %31 : vector<1x128xf32>
      %33 = arith.subf %27, %32 : vector<1x128xf32>
      %34 = tpu.concatenate %31, %33 in 0 : vector<1x128xf32>, vector<1x128xf32> -> vector<2x128xf32>
      %c0_23 = arith.constant 0 : index
      %c0_24 = arith.constant 0 : index
      %35 = vector.load %arg3[%c0_23, %c0_24] : memref<2x128xf32, #tpu.memory_space<vmem>>, vector<2x128xf32>
      tpu.vector_store %arg3[%c0_23, %c0_24], %34 {strides = array<i32>} : memref<2x128xf32, #tpu.memory_space<vmem>>, vector<2x128xf32>,
    } else {
    }
    return
  }
  func.func @transform_0(%arg0: i32) -> (i32, i32) {
    %c0_i32 = arith.constant 0 : i32
    %c0_i32_0 = arith.constant 0 : i32
    return %arg0, %c0_i32 : i32, i32
  }
  func.func @transform_1(%arg0: i32) -> (i32, i32) {
    %c0_i32 = arith.constant 0 : i32
    %c0_i32_0 = arith.constant 0 : i32
    %c0_i32_1 = arith.constant 0 : i32
    return %c0_i32, %c0_i32_0 : i32, i32
  }
  func.func @transform_2(%arg0: i32) -> (i32, i32) {
    %c0_i32 = arith.constant 0 : i32
    %c0_i32_0 = arith.constant 0 : i32
    %c0_i32_1 = arith.constant 0 : i32
    return %c0_i32, %c0_i32_0 : i32, i32
  }
}

</mosaic_0001>

<llo_original>
// kernel: tpu_custom_call.1
$region0: #{tpu_custom_call.1}
  #allocation0 [shape = 'u32[]', space=smem, size = 0x4, offset = 0x4, fixed_abs, tag = 'smem constant byte address 0x4 - core index']
  #allocation1 [shape = 'u32[72,128]{1,0:T(1,128)}', space=vmem, size = 0x9000, scoped, tag = 'internal scratch']
  #allocation2 [shape = 'f32[1,128]{1,0:T(1,128)}', space=vmem, size = 0x200, scoped, tag = 'scratch operand']
  #allocation3 [shape = 'f32[1,128]{1,0:T(1,128)}', space=vmem, size = 0x200, scoped, tag = 'scratch operand']
  %s0 = inlined_call_operand.hbm [shape: f32[24,128], index: 0, kind: input, shape index: {}]
  %s1 = inlined_call_operand.hbm [shape: f32[2,128], index: 1, kind: input, shape index: {}]
  %s2 = inlined_call_operand.hbm [shape: f32[2,128], index: 2, kind: output, shape index: {}]
  %s3 = sld [smem:[#allocation0]]
  $region34: #{tpu_custom_call.1} parent=0
    _
  %s5 = ssub.s32 1, %s3
  %s6 = scalar_select 0, %s5, %s3
  $region1: #{tpu_custom_call.1} parent=0
    #allocation4 [shape = 'u8[12288]{0}', space=vmem, size = 0x3000, scoped, tag = 'input window, operand 0, single buffered']
    #allocation5 [shape = 's32[1]{0}', space=sflag, size = 0x4, scoped, tag = 'scoped memory for tpu_custom_call.1']
    #allocation6 [shape = 's32[1]{0}', space=sflag, size = 0x4, scoped, tag = 'scoped memory for tpu_custom_call.1']
    #allocation7 [shape = 'u8[1024]{0}', space=vmem, size = 0x400, scoped, tag = 'input window, operand 1, single buffered']
    #allocation8 [shape = 's32[1]{0}', space=sflag, size = 0x4, scoped, tag = 'scoped memory for tpu_custom_call.1']
    #allocation9 [shape = 'u8[1024]{0}', space=vmem, size = 0x400, scoped, tag = 'output window, operand 0, single buffered']
    %7 = vsyncpa [#allocation5], 0
    %8 = vsyncpa [#allocation8], 0
    %9 = vsyncpa [#allocation6], 0
    // Predicated region
    $region2: #{tpu_custom_call.1} parent=1 // pred_check
      _
    $region3: #{tpu_custom_call.1} parent=1 // pred_check_branch
      %11 = sbr.rel (0) target = $region5
    $region4: #{tpu_custom_call.1} parent=1 // pred_region
      %13 = vsyncadd [#allocation5], 0
      %s14 = sshll.u32 %s0, 4
      %s15 = int_to_ptr.hbm [resolvable:$true] %s14
      %s16 = sshll.u32 [#allocation4], 4
      %s17 = int_to_ptr.vmem [resolvable:$true] %s16
      %22 = dma.hbm_to_vmem [thread:$0]  %s15, 384, %s17, [#allocation5], 128, 128, 8
    $region5: #{tpu_custom_call.1} parent=1 // pred_fallthru
      _
    // Predicated region
    $region6: #{tpu_custom_call.1} parent=1 // pred_check
      _
    $region7: #{tpu_custom_call.1} parent=1 // pred_check_branch
      %24 = sbr.rel (0) target = $region9
    $region8: #{tpu_custom_call.1} parent=1 // pred_region
      %26 = vsyncadd [#allocation8], 0
      %s28 = sshll.u32 %s1, 4
      %s29 = int_to_ptr.hbm [resolvable:$true] %s28
      %s30 = sshll.u32 [#allocation7], 4
      %s31 = int_to_ptr.vmem [resolvable:$true] %s30
      %33 = dma.hbm_to_vmem [thread:$0]  %s29, 32, %s31, [#allocation8]
    $region9: #{tpu_custom_call.1} parent=1 // pred_fallthru
      _
    // Predicated region
    $region10: #{tpu_custom_call.1} parent=1 // pred_check
      _
    $region11: #{tpu_custom_call.1} parent=1 // pred_check_branch
      %35 = sbr.rel (0) target = $region13
    $region12: #{tpu_custom_call.1} parent=1 // pred_region
      %37 = dma.done [#allocation5], 384
    $region13: #{tpu_custom_call.1} parent=1 // pred_fallthru
      _
    // Predicated region
    $region14: #{tpu_custom_call.1} parent=1 // pred_check
      _
    $region15: #{tpu_custom_call.1} parent=1 // pred_check_branch
      %39 = sbr.rel (0) target = $region17
    $region16: #{tpu_custom_call.1} parent=1 // pred_region
      %41 = dma.done [#allocation8], 32
    $region17: #{tpu_custom_call.1} parent=1 // pred_fallthru
      _
    %p42 = scmp.eq.s32.totalorder 0, 0
    // Predicated region
    $region18: #{tpu_custom_call.1} parent=1 // pred_check
      %p43 = pneg %p42
    $region19: #{tpu_custom_call.1} parent=1 // pred_check_branch
      %45 = sbr.rel (%p43) target = $region21
    $region20: #{tpu_custom_call.1} parent=1 // pred_region
      %46 = vst [vmem:[#allocation2] sm:$0x1] 0.0
      %47 = vst [vmem:[#allocation3] sm:$0x1] 0.0
    $region21: #{tpu_custom_call.1} parent=1 // pred_fallthru
      _
    %v48 = vld [vmem:[#allocation4] sm:$0xff]
    %v49 = vld [vmem:[#allocation4 + $0x8] sm:$0xff]
    %v50 = vld [vmem:[#allocation4 + $0x10] sm:$0xff]
    %v51 = vld [vmem:[#allocation2] sm:$0x1]
    %v52 = vadd.f32 %v48, %v49
    %v53 = vadd.f32 %v52, %v50
    %v54 = vrot.slane %v53, 4
    %v55 = vadd.f32 %v53, %v54
    %v56 = vrot.slane %v55, 2
    %v57 = vadd.f32 %v55, %v56
    %v58 = vrot.slane %v57, 1
    %v59 = vadd.f32 %v57, %v58
    %v60 = vadd.f32 %v51, %v59
    %61 = vst [vmem:[#allocation2] sm:$0x1] %v60
    %v62 = vld [vmem:[#allocation3] sm:$0x1]
    %v63 = vmul.f32 %v48, %v48
    %v64 = vmul.f32 %v49, %v49
    %v65 = vmul.f32 %v50, %v50
    %v66 = vadd.f32 %v63, %v64
    %v67 = vadd.f32 %v66, %v65
    %v68 = vrot.slane %v67, 4
    %v69 = vadd.f32 %v67, %v68
    %v70 = vrot.slane %v69, 2
    %v71 = vadd.f32 %v69, %v70
    %v72 = vrot.slane %v71, 1
    %v73 = vadd.f32 %v71, %v72
    %v74 = vadd.f32 %v62, %v73
    %75 = vst [vmem:[#allocation3] sm:$0x1] %v74
    // Predicated region
    $region22: #{tpu_custom_call.1} parent=1 // pred_check
      %p76 = pneg %p42
    $region23: #{tpu_custom_call.1} parent=1 // pred_check_branch
      %78 = sbr.rel (%p76) target = $region25
    $region24: #{tpu_custom_call.1} parent=1 // pred_region
      %v79 = vld [vmem:[#allocation2] sm:$0x1]
      %v80 = vmul.f32 %v79, 0.041666668
      %v81 = vld [vmem:[#allocation3] sm:$0x1]
      %v82 = vmul.f32 %v81, 0.041666668
      %v83 = vmul.f32 %v80, %v80
      %v84 = vsub.f32 %v82, %v83
      %v85 = vld [vmem:[#allocation7] sm:$0x1]
      %v86 = vld [vmem:[#allocation7 + $0x1] sm:$0x1]
      %v87 = vadd.f32 %v84, 1e-05
      %v88 = vrsqrt.pop %v87
      %v89 = vmul.f32 %v88, %v87
      %v90 = vmul.f32 %v89, %v88
      %v91 = vmul.f32 0.5, %v90
      %v92 = vsub.f32 1.5, %v91
      %v93 = vmul.f32 %v88, %v92
      %vm94 = vweird.f32 %v87
      %vm95 = vweird.f32 %v88
      %vm96 = vmor %vm94, %vm95
      %v97 = vsel %vm96, %v88, %v93
      %v98 = vmul.f32 %v85, %v97
      %v99 = vmul.f32 %v80, %v98
      %v100 = vsub.f32 %v86, %v99
      %v102 = vrot.slane %v100, 7
      %vm104 = vcmask 1040384
      %v105 = vsel %vm104, %v98, %v102
      %106 = vst [vmem:[#allocation9] sm:$0x3] %v105
    $region25: #{tpu_custom_call.1} parent=1 // pred_fallthru
      _
    // Predicated region
    $region26: #{tpu_custom_call.1} parent=1 // pred_check
      _
    $region27: #{tpu_custom_call.1} parent=1 // pred_check_branch
      %108 = sbr.rel (0) target = $region29
    $region28: #{tpu_custom_call.1} parent=1 // pred_region
      %110 = vsyncadd [#allocation6], 0
      %s112 = sshll.u32 [#allocation9], 4
      %s113 = int_to_ptr.vmem [resolvable:$true] %s112
      %s114 = sshll.u32 %s2, 4
      %s115 = int_to_ptr.hbm [resolvable:$true] %s114
      %117 = dma.vmem_to_hbm [thread:$0]  %s113, 32, %s115, [#allocation6]
    $region29: #{tpu_custom_call.1} parent=1 // pred_fallthru
      _
    // Predicated region
    $region30: #{tpu_custom_call.1} parent=1 // pred_check
      _
    $region31: #{tpu_custom_call.1} parent=1 // pred_check_branch
      %119 = sbr.rel (0) target = $region33
    $region32: #{tpu_custom_call.1} parent=1 // pred_region
      %121 = dma.done [#allocation6], 32
    $region33: #{tpu_custom_call.1} parent=1 // pred_fallthru
      _
    %122 = vsyncpa [#allocation5], 1
    %123 = vsyncpa [#allocation8], 1
    %124 = vsyncpa [#allocation6], 1

</llo_original>
